<compile_context>
chip_gen: v7x
topology: tpu7x:2x2x1
jax: 0.10.0
libtpu: 0.0.40
codegen_flags: <defaults>
</compile_context>

<pallas_src>
import functools

import jax
import jax.numpy as jnp
from jax.experimental import pallas as pl
from jax.experimental.pallas import tpu as pltpu


def _focal_loss_kernel(logits_ref, labels_ref, out_ref, *, alpha, gamma, n_valid):
    # logits_ref: (C, TN) native dtype, labels_ref: (1, TN) int32
    logits = logits_ref[...].astype(jnp.float32)          # cast in-kernel (bf16 on the wire)
    labels = labels_ref[...]                               # (1, TN) int32
    C, TN = logits.shape

    # --- softmax over the class (sublane) axis via log-sum-exp (never materialize probs) ---
    m = jnp.max(logits, axis=0, keepdims=True)             # (1, TN)
    e = jnp.exp(logits - m)                                 # (C, TN)
    sum_e = jnp.sum(e, axis=0, keepdims=True)               # (1, TN)

    # --- gather the labelled class' logit: one-hot over the (tiny) class axis ---
    cls = jax.lax.broadcasted_iota(jnp.int32, (C, TN), 0)
    onehot = cls == labels                                  # (C, TN)
    logit_t = jnp.sum(jnp.where(onehot, logits, 0.0), axis=0, keepdims=True)  # (1, TN)

    log_pt = (logit_t - m) - jnp.log(sum_e)                 # exact log softmax of target class
    pred_t = jnp.exp(log_pt)                                # (1, TN)

    # --- focal loss terms ---
    alpha_t = jnp.where(labels == 1, jnp.float32(alpha), jnp.float32(1.0 - alpha))
    one_minus = 1.0 - pred_t

    g = float(gamma)
    if g == int(g) and 0.0 <= g <= 8.0:
        gi = int(g)
        if gi == 0:
            w_pow = jnp.ones_like(one_minus)
        else:
            w_pow = one_minus
            for _ in range(gi - 1):                          # gamma=2 -> single VPU multiply
                w_pow = w_pow * one_minus
    else:
        w_pow = jnp.power(one_minus, jnp.float32(g))

    loss = (-1.0) * alpha_t * w_pow * log_pt                # (1, TN)

    # --- mask padded batch columns (only emitted when padding exists) ---
    if n_valid is not None:
        col = jax.lax.broadcasted_iota(jnp.int32, (1, TN), 1) + pl.program_id(0) * TN
        loss = jnp.where(col < n_valid, loss, 0.0)

    # per-block partial sum, broadcast to a lane-dense (1, 128) output block
    partial = jnp.sum(loss)
    out_ref[...] = jnp.broadcast_to(partial, (1, 128)).astype(jnp.float32)


def focal_loss_classification(logits, labels, alpha=0.25, gamma=2.0, average=True):
    """JAX/Pallas equivalent of Focal_Loss_Classification.forward."""
    N, C = logits.shape
    if labels.ndim == 2:
        labels = labels.reshape(N)
    labels2 = labels.astype(jnp.int32).reshape(1, N)        # (1, N)
    logits_t = jnp.transpose(logits)                        # (C, N), native dtype kept

    # --- choose a lane-tile TN (multiple of 128), ~512 KiB of logits per block ---
    elt = jnp.dtype(logits.dtype).itemsize
    n128 = ((N + 127) // 128) * 128
    target_bytes = 512 * 1024
    tn = (target_bytes // max(1, C * elt)) // 128 * 128
    tn = max(128, min(tn, n128))
    n_pad = ((n128 + tn - 1) // tn) * tn
    grid_n = n_pad // tn

    if n_pad != N:
        logits_t = jnp.pad(logits_t, ((0, 0), (0, n_pad - N)))
        labels2 = jnp.pad(labels2, ((0, 0), (0, n_pad - N)))

    kernel = functools.partial(
        _focal_loss_kernel,
        alpha=float(alpha),
        gamma=float(gamma),
        n_valid=(None if n_pad == N else int(N)),
    )

    partials = pl.pallas_call(
        kernel,
        out_shape=jax.ShapeDtypeStruct((1, grid_n * 128), jnp.float32),
        grid=(grid_n,),
        in_specs=[
            pl.BlockSpec((C, tn), lambda i: (0, i)),        # logits (C, TN)
            pl.BlockSpec((1, tn), lambda i: (0, i)),        # labels (1, TN)
        ],
        out_specs=pl.BlockSpec((1, 128), lambda i: (0, i)),  # lane-dense partial sums
        compiler_params=pltpu.CompilerParams(
            dimension_semantics=("parallel",),               # lets v7x shard across 2 TCs
            vmem_limit_bytes=32 * 1024 * 1024,
        ),
    )(logits_t, labels2)

    # final reduction + average use the *global* batch size
    total = jnp.sum(partials.reshape(grid_n, 128)[:, 0])
    if average:
        total = total / jnp.float32(N)
    return total


def _reference(logits, labels, alpha=0.25, gamma=2.0, average=True):
    """Pure-JAX reference mirroring the PyTorch module."""
    probs = jax.nn.softmax(logits.astype(jnp.float32), axis=-1)
    lab = labels.astype(jnp.int32)
    if lab.ndim != probs.ndim:
        lab = lab[:, None]
    pred_t = jnp.take_along_axis(probs, lab, axis=1)
    alpha_t = jnp.where(lab == 1, alpha, 1.0 - alpha)
    weight = -1.0 * alpha_t * jnp.power(1.0 - pred_t, gamma)
    loss = jnp.sum(weight * jnp.log(pred_t))
    if average:
        loss = loss / probs.shape[0]
    return loss


if __name__ == "__main__":
    key = jax.random.PRNGKey(0)
    k1, k2, k3, k4 = jax.random.split(key, 4)

    # Binary classification: batch=8, num_classes=2 (f32).
    logits = jax.random.normal(k1, (8, 2), dtype=jnp.float32)
    labels = jax.random.randint(k2, (8,), 0, 2, dtype=jnp.int32)
    out = focal_loss_classification(logits, labels, alpha=0.25, gamma=2.0, average=True)
    out = jax.block_until_ready(out)
    ref = _reference(logits, labels, alpha=0.25, gamma=2.0, average=True)
    assert jnp.allclose(out, ref, rtol=1e-5, atol=1e-6), (out, ref)

    # bf16 logits + batch not a multiple of 128 (exercises native-dtype wire + lane mask).
    logits_bf16 = jax.random.normal(k3, (50, 2), dtype=jnp.bfloat16)
    labels2 = jax.random.randint(k4, (50,), 0, 2, dtype=jnp.int32)
    out2 = focal_loss_classification(logits_bf16, labels2, alpha=0.25, gamma=2.0, average=True)
    out2 = jax.block_until_ready(out2)
    ref2 = _reference(logits_bf16, labels2, alpha=0.25, gamma=2.0, average=True)
    assert jnp.allclose(out2, ref2, rtol=1e-4, atol=1e-4), (out2, ref2)

    print("KERNEL_OK")
</pallas_src>

<mosaic_0001>
module attributes {stable_mosaic.version = 11 : i64} {
  func.func @_focal_loss_kernel(%arg0: i32, %arg1: memref<2x128xf32, #tpu.memory_space<vmem>>, %arg2: memref<1x128xi32, #tpu.memory_space<vmem>>, %arg3: memref<1x128xf32, #tpu.memory_space<vmem>>) attributes {dimension_semantics = [#tpu.dimension_semantics<parallel>], iteration_bounds = array<i64: 1>, scalar_prefetch = 0 : i64, scratch_operands = 0 : i64, tpu.core_type = #tpu.core_type<tc>, window_params = [{transform_indices = @transform_0, window_bounds = array<i64: 2, 128>}, {transform_indices = @transform_1, window_bounds = array<i64: 1, 128>}, {transform_indices = @transform_2, window_bounds = array<i64: 1, 128>}]} {
    %c0 = arith.constant 0 : index
    %c0_0 = arith.constant 0 : index
    %0 = vector.load %arg1[%c0, %c0_0] : memref<2x128xf32, #tpu.memory_space<vmem>>, vector<2x128xf32>
    %c0_1 = arith.constant 0 : index
    %c0_2 = arith.constant 0 : index
    %1 = vector.load %arg2[%c0_1, %c0_2] : memref<1x128xi32, #tpu.memory_space<vmem>>, vector<1x128xi32>
    %cst = arith.constant dense<0xFF800000> : vector<128xf32>
    %2 = vector.multi_reduction <maximumf>, %0, %cst [0] : vector<2x128xf32> to vector<128xf32>
    %3 = vector.shape_cast %2 : vector<128xf32> to vector<1x128xf32>
    %4 = vector.broadcast %3 : vector<1x128xf32> to vector<2x128xf32>
    %5 = arith.subf %0, %4 : vector<2x128xf32>
    %6 = math.exp %5 : vector<2x128xf32>
    %cst_3 = arith.constant dense<0.000000e+00> : vector<128xf32>
    %7 = vector.multi_reduction <add>, %6, %cst_3 [0] : vector<2x128xf32> to vector<128xf32>
    %8 = vector.shape_cast %7 : vector<128xf32> to vector<1x128xf32>
    %9 = tpu.iota {dimensions = array<i32: 0>} : vector<2x128xi32>
    %10 = vector.broadcast %1 : vector<1x128xi32> to vector<2x128xi32>
    %11 = arith.cmpi eq, %9, %10 : vector<2x128xi32>
    %cst_4 = arith.constant 0.000000e+00 : f32
    %12 = vector.broadcast %cst_4 : f32 to vector<2x128xf32>
    %13 = arith.select %11, %0, %12 : vector<2x128xi1>, vector<2x128xf32>
    %cst_5 = arith.constant dense<0.000000e+00> : vector<128xf32>
    %14 = vector.multi_reduction <add>, %13, %cst_5 [0] : vector<2x128xf32> to vector<128xf32>
    %15 = vector.shape_cast %14 : vector<128xf32> to vector<1x128xf32>
    %16 = arith.subf %15, %3 : vector<1x128xf32>
    %17 = math.log %8 : vector<1x128xf32>
    %18 = arith.subf %16, %17 : vector<1x128xf32>
    %19 = math.exp %18 : vector<1x128xf32>
    %c1_i32 = arith.constant 1 : i32
    %20 = vector.broadcast %c1_i32 : i32 to vector<1x128xi32>
    %21 = arith.cmpi eq, %1, %20 : vector<1x128xi32>
    %cst_6 = arith.constant 2.500000e-01 : f32
    %cst_7 = arith.constant 7.500000e-01 : f32
    %22 = vector.broadcast %cst_6 : f32 to vector<1x128xf32>
    %23 = vector.broadcast %cst_7 : f32 to vector<1x128xf32>
    %24 = arith.select %21, %22, %23 : vector<1x128xi1>, vector<1x128xf32>
    %cst_8 = arith.constant 1.000000e+00 : f32
    %25 = vector.broadcast %cst_8 : f32 to vector<1x128xf32>
    %26 = arith.subf %25, %19 : vector<1x128xf32>
    %27 = arith.mulf %26, %26 : vector<1x128xf32>
    %cst_9 = arith.constant -1.000000e+00 : f32
    %28 = vector.broadcast %cst_9 : f32 to vector<1x128xf32>
    %29 = arith.mulf %28, %24 : vector<1x128xf32>
    %30 = arith.mulf %29, %27 : vector<1x128xf32>
    %31 = arith.mulf %30, %18 : vector<1x128xf32>
    %32 = tpu.iota {dimensions = array<i32: 1>} : vector<1x128xi32>
    %c128_i32 = arith.constant 128 : i32
    %33 = arith.muli %arg0, %c128_i32 : i32
    %34 = vector.broadcast %33 : i32 to vector<1x128xi32>
    %35 = arith.addi %32, %34 : vector<1x128xi32>
    %c8_i32 = arith.constant 8 : i32
    %36 = vector.broadcast %c8_i32 : i32 to vector<1x128xi32>
    %37 = arith.cmpi slt, %35, %36 : vector<1x128xi32>
    %cst_10 = arith.constant 0.000000e+00 : f32
    %38 = vector.broadcast %cst_10 : f32 to vector<1x128xf32>
    %39 = arith.select %37, %31, %38 : vector<1x128xi1>, vector<1x128xf32>
    %40 = vector.shape_cast %39 : vector<1x128xf32> to vector<1x1x128xf32>
    %cst_11 = arith.constant dense<0.000000e+00> : vector<1xf32>
    %41 = vector.multi_reduction <add>, %40, %cst_11 [1, 2] : vector<1x1x128xf32> to vector<1xf32>
    %42 = vector.shape_cast %41 : vector<1xf32> to vector<1x1x1xf32>
    %43 = vector.extract %42[0, 0, 0] : f32 from vector<1x1x1xf32>
    %44 = vector.broadcast %43 : f32 to vector<1x128xf32>
    %c0_12 = arith.constant 0 : index
    %c0_13 = arith.constant 0 : index
    %45 = vector.load %arg3[%c0_12, %c0_13] : memref<1x128xf32, #tpu.memory_space<vmem>>, vector<1x128xf32>
    tpu.vector_store %arg3[%c0_12, %c0_13], %44 {strides = array<i32>} : memref<1x128xf32, #tpu.memory_space<vmem>>, vector<1x128xf32>,
    return
  }
  func.func @transform_0(%arg0: i32) -> (i32, i32) {
    %c0_i32 = arith.constant 0 : i32
    %c0_i32_0 = arith.constant 0 : i32
    return %c0_i32, %arg0 : i32, i32
  }
  func.func @transform_1(%arg0: i32) -> (i32, i32) {
    %c0_i32 = arith.constant 0 : i32
    %c0_i32_0 = arith.constant 0 : i32
    return %c0_i32, %arg0 : i32, i32
  }
  func.func @transform_2(%arg0: i32) -> (i32, i32) {
    %c0_i32 = arith.constant 0 : i32
    %c0_i32_0 = arith.constant 0 : i32
    return %c0_i32, %arg0 : i32, i32
  }
}

</mosaic_0001>

<llo_original>
// kernel: tpu_custom_call.1
$region0: #{tpu_custom_call.1}
  #allocation0 [shape = 'u32[]', space=smem, size = 0x4, offset = 0x4, fixed_abs, tag = 'smem constant byte address 0x4 - core index']
  #allocation1 [shape = 'u32[144,128]{1,0:T(1,128)}', space=vmem, size = 0x12000, scoped, tag = 'internal scratch']
  %s0 = inlined_call_operand.hbm [shape: f32[2,128], index: 0, kind: input, shape index: {}]
  %s1 = inlined_call_operand.vmem [shape: s32[1,128], index: 1, kind: input, shape index: {}]
  %s2 = inlined_call_operand.hbm [shape: f32[1,128], index: 2, kind: output, shape index: {}]
  %s3 = sld [smem:[#allocation0]]
  $region22: #{tpu_custom_call.1} parent=0
    _
  %s5 = ssub.s32 1, %s3
  %s6 = scalar_select 0, %s5, %s3
  $region1: #{tpu_custom_call.1} parent=0
    #allocation2 [shape = 'u8[1024]{0}', space=vmem, size = 0x400, scoped, tag = 'input window, operand 0, single buffered']
    #allocation3 [shape = 's32[1]{0}', space=sflag, size = 0x4, scoped, tag = 'scoped memory for tpu_custom_call.1']
    #allocation4 [shape = 's32[1]{0}', space=sflag, size = 0x4, scoped, tag = 'scoped memory for tpu_custom_call.1']
    #allocation5 [shape = 'u8[512]{0}', space=vmem, size = 0x400, scoped, tag = 'output window, operand 0, single buffered']
    %7 = vsyncpa [#allocation3], 0
    %8 = vsyncpa [#allocation4], 0
    // Predicated region
    $region2: #{tpu_custom_call.1} parent=1 // pred_check
      _
    $region3: #{tpu_custom_call.1} parent=1 // pred_check_branch
      %10 = sbr.rel (0) target = $region5
    $region4: #{tpu_custom_call.1} parent=1 // pred_region
      %s12 = ssub.s32 32, 32
      %13 = vsyncadd [#allocation3], %s12
      %s15 = sshll.u32 [#allocation2], 4
      %s16 = int_to_ptr.vmem [resolvable:$true] %s15
      %18 = dma.hbm_to_vmem [thread:$0]  %s0, 32, %s16, [#allocation3]
    $region5: #{tpu_custom_call.1} parent=1 // pred_fallthru
      _
    // Predicated region
    $region6: #{tpu_custom_call.1} parent=1 // pred_check
      _
    $region7: #{tpu_custom_call.1} parent=1 // pred_check_branch
      %20 = sbr.rel (0) target = $region9
    $region8: #{tpu_custom_call.1} parent=1 // pred_region
      _
    $region9: #{tpu_custom_call.1} parent=1 // pred_fallthru
      _
    // Predicated region
    $region10: #{tpu_custom_call.1} parent=1 // pred_check
      _
    $region11: #{tpu_custom_call.1} parent=1 // pred_check_branch
      %22 = sbr.rel (0) target = $region13
    $region12: #{tpu_custom_call.1} parent=1 // pred_region
      %23 = dma.done [#allocation3], 32
    $region13: #{tpu_custom_call.1} parent=1 // pred_fallthru
      _
    %v24 = vld [vmem:[#allocation2] sm:$0x3]
    %v25 = vld [vmem:[%s1] sm:$0x1]
    %vm26 = vcmask 1041408
    %v27 = vsel %vm26, %v24, -inf
    %v28 = vrot.slane %v27, 4
    %v29 = vmax.f32 %v27, %v28
    %v30 = vrot.slane %v29, 2
    %v31 = vmax.f32 %v29, %v30
    %v32 = vrot.slane %v31, 1
    %v33 = vmax.f32 %v31, %v32
    %v34 = vsub.f32 %v24, %v33
    %v35 = vmul.f32 %v34, 1.442695
    %v36 = vpow.pop %v35
    %v37 = vsel %vm26, %v36, 0.0
    %v38 = vrot.slane %v37, 4
    %v39 = vadd.f32 %v37, %v38
    %v40 = vrot.slane %v39, 2
    %v41 = vadd.f32 %v39, %v40
    %v42 = vrot.slane %v41, 1
    %v43 = vadd.f32 %v41, %v42
    %v44 = vlaneseq
    %v45 = vshrl.u32 %v44, 7
    %v46 = vlaneseq
    %v47 = vshrl.u32 %v46, 7
    %v48 = vsub.s32 0, %v47
    %v49 = vrot.slane %v25, %v48
    %vm50 = vcmp.eq.s32.totalorder %v45, %v49
    %v51 = vsel %vm50, %v24, 0.0
    %v52 = vsel %vm26, %v51, 0.0
    %v53 = vrot.slane %v52, 4
    %v54 = vadd.f32 %v52, %v53
    %v55 = vrot.slane %v54, 2
    %v56 = vadd.f32 %v54, %v55
    %v57 = vrot.slane %v56, 1
    %v58 = vadd.f32 %v56, %v57
    %v59 = vsub.f32 %v58, %v33
    %v60 = vlog2.pop %v43
    %v61 = vmul.f32 %v60, 0.6931472
    %v62 = vsub.f32 %v59, %v61
    %v63 = vmul.f32 %v62, 1.442695
    %v64 = vpow.pop %v63
    %vm65 = vcmp.eq.s32.totalorder %v25, 1
    %v66 = vsel %vm65, 0.25, 0.75
    %v67 = vsub.f32 1.0, %v64
    %v68 = vmul.f32 %v67, %v67
    %v69 = vmul.f32 %v66, -1.0
    %v70 = vmul.f32 %v69, %v68
    %v71 = vmul.f32 %v70, %v62
    %v72 = vlaneseq
    %v73 = vand.u32 %v72, 127
    %s74 = smul.u32 0, 128
    %v75 = vstv %s74
    %v76 = vadd.s32 %v73, %v75
    %vm77 = vcmp.lt.s32.totalorder %v76, 8
    %v78 = vsel %vm77, %v71, 0.0
    %vm79 = vcmask 1040384
    %v80 = vsel %vm79, %v78, 0.0
    %81 = vadd.xlane.f32.xlu0 %v80
    %v82 = vpop.xlane.xlu0 %81
    %v83 = vrot.slane %v82, 4
    %v84 = vadd.f32 %v82, %v83
    %v85 = vrot.slane %v84, 2
    %v86 = vadd.f32 %v84, %v85
    %v87 = vrot.slane %v86, 1
    %v88 = vadd.f32 %v86, %v87
    %s89 = vtos %v88
    %v90 = vstv %s89
    %91 = vst [vmem:[#allocation5] sm:$0x1] %v90
    // Predicated region
    $region14: #{tpu_custom_call.1} parent=1 // pred_check
      _
    $region15: #{tpu_custom_call.1} parent=1 // pred_check_branch
      %93 = sbr.rel (0) target = $region17
    $region16: #{tpu_custom_call.1} parent=1 // pred_region
      %s95 = ssub.s32 16, 16
      %96 = vsyncadd [#allocation4], %s95
      %s98 = sshll.u32 [#allocation5], 4
      %s99 = int_to_ptr.vmem [resolvable:$true] %s98
      %101 = dma.vmem_to_hbm [thread:$0]  %s99, 16, %s2, [#allocation4]
    $region17: #{tpu_custom_call.1} parent=1 // pred_fallthru
      _
    // Predicated region
    $region18: #{tpu_custom_call.1} parent=1 // pred_check
      _
    $region19: #{tpu_custom_call.1} parent=1 // pred_check_branch
      %103 = sbr.rel (0) target = $region21
    $region20: #{tpu_custom_call.1} parent=1 // pred_region
      %104 = dma.done [#allocation4], 16
    $region21: #{tpu_custom_call.1} parent=1 // pred_fallthru
      _
    %105 = vsyncpa [#allocation3], 1
    %106 = vsyncpa [#allocation4], 1

</llo_original>
